<compile_context>
chip_gen: v7x
topology: tpu7x:2x2x1
jax: 0.10.0
libtpu: 0.0.40
codegen_flags: <defaults>
</compile_context>

<pallas_src>
import functools

import jax
import jax.numpy as jnp
from jax.experimental import pallas as pl
from jax.experimental.pallas import tpu as pltpu


def _round_up(x, m):
    return ((x + m - 1) // m) * m


def _varconv_kernel(u_ref, w_ref, b_ref, eps_ref, out_ref, kld_ref, *,
                    oc, tile_l, l_valid, needs_mask):
    u = u_ref[0]                                                    # (K, tl) bf16
    # Fused heads: one MXU matmul producing [mu ; logvar] stacked on sublanes.
    y = jnp.dot(w_ref[...], u,
                preferred_element_type=jnp.float32) + b_ref[...]    # (2*OC, tl) f32
    mu = y[:oc, :]
    lv = y[oc:, :]

    std = jnp.exp(0.5 * lv)
    eps = eps_ref[0]                                                # (OC, tl) f32
    z = eps * std + mu
    out_ref[0] = z.astype(out_ref.dtype)                            # lane-dense store

    # KLD partial for this tile.  exp(logvar) == std*std reuses the EUP result.
    term = 1.0 + lv - z * z - std * std                             # (OC, tl)

    def fold(t):
        # Log-depth tree of 128-lane-wide VALU adds (vreg-aligned slices).
        chunks = [t[:, c * 128:(c + 1) * 128] for c in range(tile_l // 128)]
        while len(chunks) > 1:
            nxt = [a + b for a, b in zip(chunks[0::2], chunks[1::2])]
            if len(chunks) % 2:
                nxt.append(chunks[-1])
            chunks = nxt
        return -0.5 * chunks[0]                                     # (OC, 128)

    if needs_mask:
        l = pl.program_id(1)
        is_last = l == pl.num_programs(1) - 1

        @pl.when(jnp.logical_not(is_last))
        def _():
            kld_ref[0, 0] = fold(term)

        @pl.when(is_last)
        def _():
            col = jax.lax.broadcasted_iota(jnp.int32, (1, tile_l), 1)
            masked = jnp.where(l * tile_l + col < l_valid, term, 0.0)
            kld_ref[0, 0] = fold(masked)
    else:
        kld_ref[0, 0] = fold(term)


def _unfold_nkl(x, kernel_size, stride, padding):
    """torch.nn.Unfold equivalent: (N,C,H,W) -> ((N, C*kh*kw, fv*fh), fv, fh)."""
    N, C, H, W = x.shape
    kh, kw = kernel_size
    sh, sw = stride
    ph, pw = padding
    xp = jnp.pad(x, ((0, 0), (0, 0), (ph, ph), (pw, pw)))
    fv = (H + 2 * ph - kh) // sh + 1
    fh = (W + 2 * pw - kw) // sw + 1
    patches = []
    for ki in range(kh):
        for kj in range(kw):
            patches.append(xp[:, :, ki:ki + sh * fv:sh, kj:kj + sw * fh:sw])
    # (N, C, kh*kw, fv, fh) -> (N, C*kh*kw, L) with torch unfold's channel-major order.
    u = jnp.stack(patches, axis=2).reshape(N, C * kh * kw, fv * fh)
    return u.astype(jnp.float32), fv, fh


def _vmem_budget_bytes():
    try:
        cap = pltpu.get_tpu_info().vmem_capacity_bytes
        return max(8 << 20, min(cap // 4, 24 << 20))
    except Exception:          # interpret / CPU fallback
        return 16 << 20


def _pick_tile_l(L, K, oc, n_batch, max_tl=8192):
    """Largest lane-tile (multiple of 128) fitting a conservative VMEM budget, keeping
    at least two grid tiles when possible so both v7x TensorCores get work."""
    budget = _vmem_budget_bytes()
    target = _round_up(L, 128)
    if n_batch == 1 and target >= 256:
        target = _round_up((target + 1) // 2, 128)    # >= 2 l-tiles

    def vmem_need(t):
        per_col = (2 * K * 2          # double-buffered bf16 u tile
                   + 2 * oc * 4       # double-buffered f32 eps tile
                   + 2 * oc * 4       # double-buffered f32 out tile
                   + 8 * oc * 4)      # y/mu/lv/std/z/term f32 intermediates
        fixed = (2 * (2 * oc) * K * 2         # resident fused bf16 weights (db)
                 + 2 * (2 * oc) * 128 * 4     # bias tile (db, padded)
                 + 2 * oc * 128 * 4)          # kld partials out (db)
        return t * per_col + fixed

    tl = max(128, min(max_tl, target))
    while tl > 128 and vmem_need(tl) > budget:
        tl -= 128
    return tl


def var_conv2d_forward(x, w_mu, b_mu, w_lv, b_lv, key,
                       kernel_size, stride, padding, tile_l=None):
    """Training-mode VarConv2d forward.  Returns (output (N,OC,fv,fh), kld scalar)."""
    N, C, H, W = x.shape
    kh, kw = kernel_size
    oc = w_mu.shape[0]
    K = C * kh * kw
    assert w_mu.shape == (oc, K) and w_lv.shape == (oc, K)

    # TODO(synk): fuse the im2col into the kernel (strided pltpu.make_async_copy of
    # padded x row-strips from HBM via memory_space=pl.ANY) to avoid materializing the
    # kh*kw-inflated u matrix in HBM at large scale.
    u, fv, fh = _unfold_nkl(x, kernel_size, stride, padding)        # (N, K, L) f32
    L = fv * fh

    if tile_l is None:
        tile_l = _pick_tile_l(L, K, oc, N)
    tl = max(128, min(_round_up(tile_l, 128), _round_up(L, 128)))
    L_pad = _round_up(L, tl)
    grid_l = L_pad // tl

    u_bf = u.astype(jnp.bfloat16)                                   # halve HBM stream
    eps = jax.random.normal(key, (N, oc, L), dtype=jnp.float32)
    if L_pad != L:
        u_bf = jnp.pad(u_bf, ((0, 0), (0, 0), (0, L_pad - L)))
        eps_p = jnp.pad(eps, ((0, 0), (0, 0), (0, L_pad - L)))
    else:
        eps_p = eps

    # Fused heads: single (2*OC, K) bf16 weight / (2*OC, 1) f32 bias.
    w_cat = jnp.concatenate([w_mu, w_lv], axis=0).astype(jnp.bfloat16)
    b_cat = jnp.concatenate([b_mu, b_lv], axis=0).reshape(2 * oc, 1).astype(jnp.float32)

    kernel = functools.partial(_varconv_kernel, oc=oc, tile_l=tl,
                               l_valid=L, needs_mask=(L_pad != L))

    z, kld_parts = pl.pallas_call(
        kernel,
        out_shape=(
            jax.ShapeDtypeStruct((N, oc, L_pad), jnp.float32),
            jax.ShapeDtypeStruct((N, grid_l, oc, 128), jnp.float32),
        ),
        grid_spec=pltpu.PrefetchScalarGridSpec(
            num_scalar_prefetch=0,
            grid=(N, grid_l),
            in_specs=[
                pl.BlockSpec((1, K, tl), lambda n, l: (n, 0, l)),        # u tile
                pl.BlockSpec((2 * oc, K), lambda n, l: (0, 0)),          # [Wmu; Wlv]
                pl.BlockSpec((2 * oc, 1), lambda n, l: (0, 0)),          # [bmu; blv]
                pl.BlockSpec((1, oc, tl), lambda n, l: (n, 0, l)),       # eps tile
            ],
            out_specs=[
                pl.BlockSpec((1, oc, tl), lambda n, l: (n, 0, l)),       # z tile
                pl.BlockSpec((1, 1, oc, 128), lambda n, l: (n, l, 0, 0)),  # kld partial
            ],
        ),
        compiler_params=pltpu.CompilerParams(
            dimension_semantics=("parallel", "parallel"),  # tiles fully independent
            vmem_limit_bytes=32 * 1024 * 1024,
        ),
    )(u_bf, w_cat, b_cat, eps_p)

    kld = jnp.sum(kld_parts)
    # fold with a (1,1) kernel: (N, OC, L) -> (N, OC, fv, fh); no transpose needed.
    out = z[:, :, :L].reshape(N, oc, fv, fh)
    return out, kld


def _check_forward(out, kld, x, w_mu, b_mu, w_lv, b_lv, key,
                   kernel_size, stride, padding):
    """Full f32 reference (eps regenerated from the same key)."""
    u, fv, fh = _unfold_nkl(x, kernel_size, stride, padding)        # f32
    N = x.shape[0]
    oc = w_mu.shape[0]
    L = fv * fh
    hi = jax.lax.Precision.HIGHEST
    mu = jnp.einsum('ok,nkl->nol', w_mu, u, precision=hi) + b_mu[None, :, None]
    lv = jnp.einsum('ok,nkl->nol', w_lv, u, precision=hi) + b_lv[None, :, None]
    std = jnp.exp(0.5 * lv)
    eps = jax.random.normal(key, (N, oc, L), dtype=jnp.float32)
    z = eps * std + mu
    out_ref = z.reshape(N, oc, fv, fh)
    kld_ref = -0.5 * jnp.sum(1.0 + lv - z * z - jnp.exp(lv))

    assert out.shape == out_ref.shape, (out.shape, out_ref.shape)
    max_err = float(jnp.max(jnp.abs(out - out_ref)))
    assert jnp.allclose(out, out_ref, rtol=5e-2, atol=1.5e-1), max_err
    assert jnp.allclose(kld, kld_ref, rtol=2e-2, atol=2.0), (float(kld), float(kld_ref))


if __name__ == "__main__":
    # Module config: VarConv2d(in_channels=4, out_channels=8, kernel_size=3,
    #                          stride=1, padding=1, bias=True, is_variational=True)
    in_channels, out_channels = 4, 8
    kernel_size, stride, padding = (3, 3), (1, 1), (1, 1)
    N, H, W = 2, 16, 16
    nb_in = kernel_size[0] * kernel_size[1] * in_channels

    key = jax.random.PRNGKey(0)
    kx, kwmu, kbmu, kwlv, kblv, kx2, ke1, ke2, ke3 = jax.random.split(key, 9)

    x = jax.random.normal(kx, (N, in_channels, H, W), dtype=jnp.float32)

    # Deterministic parameter init (Linear(nb_in, out_channels) shapes).
    bound = 1.0 / (nb_in ** 0.5)
    w_mu = jax.random.uniform(kwmu, (out_channels, nb_in), jnp.float32, -bound, bound)
    b_mu = jax.random.uniform(kbmu, (out_channels,), jnp.float32, -bound, bound)
    w_lv = jax.random.uniform(kwlv, (out_channels, nb_in), jnp.float32, -bound, bound)
    b_lv = jax.random.uniform(kblv, (out_channels,), jnp.float32, -bound, bound)

    # 1) Default tiling: L = 16*16 = 256 -> tl = 256, grid = (2, 1) (one tile / image).
    out, kld = var_conv2d_forward(x, w_mu, b_mu, w_lv, b_lv, ke1,
                                  kernel_size, stride, padding)
    out, kld = jax.block_until_ready(out), jax.block_until_ready(kld)
    _check_forward(out, kld, x, w_mu, b_mu, w_lv, b_lv, ke1,
                   kernel_size, stride, padding)

    # 2) Multi-tile path: tile_l=128 -> grid = (2, 2), all tiles independent/"parallel".
    out2, kld2 = var_conv2d_forward(x, w_mu, b_mu, w_lv, b_lv, ke2,
                                    kernel_size, stride, padding, tile_l=128)
    out2, kld2 = jax.block_until_ready(out2), jax.block_until_ready(kld2)
    _check_forward(out2, kld2, x, w_mu, b_mu, w_lv, b_lv, ke2,
                   kernel_size, stride, padding)

    # 3) Ragged path: L = 10*10 = 100 -> padded to 128, masked KLD on the last tile.
    x3 = jax.random.normal(kx2, (1, in_channels, 10, 10), dtype=jnp.float32)
    out3, kld3 = var_conv2d_forward(x3, w_mu, b_mu, w_lv, b_lv, ke3,
                                    kernel_size, stride, padding)
    out3, kld3 = jax.block_until_ready(out3), jax.block_until_ready(kld3)
    _check_forward(out3, kld3, x3, w_mu, b_mu, w_lv, b_lv, ke3,
                   kernel_size, stride, padding)

    print("KERNEL_OK")
</pallas_src>

<mosaic_0001>
module attributes {stable_mosaic.version = 11 : i64} {
  func.func @_varconv_kernel(%arg0: i32, %arg1: i32, %arg2: memref<1x36x256xbf16, #tpu.memory_space<vmem>>, %arg3: memref<16x36xbf16, #tpu.memory_space<vmem>>, %arg4: memref<16x1xf32, #tpu.memory_space<vmem>>, %arg5: memref<1x8x256xf32, #tpu.memory_space<vmem>>, %arg6: memref<1x8x256xf32, #tpu.memory_space<vmem>>, %arg7: memref<1x1x8x128xf32, #tpu.memory_space<vmem>>) attributes {dimension_semantics = [#tpu.dimension_semantics<parallel>, #tpu.dimension_semantics<parallel>], iteration_bounds = array<i64: 2, 1>, scalar_prefetch = 0 : i64, scratch_operands = 0 : i64, tpu.core_type = #tpu.core_type<tc>, window_params = [{transform_indices = @transform_0, window_bounds = array<i64: 1, 36, 256>}, {pipeline_mode = #tpu.pipeline_mode<synchronous>, transform_indices = @transform_1, window_bounds = array<i64: 16, 36>}, {pipeline_mode = #tpu.pipeline_mode<synchronous>, transform_indices = @transform_2, window_bounds = array<i64: 16, 1>}, {transform_indices = @transform_3, window_bounds = array<i64: 1, 8, 256>}, {transform_indices = @transform_4, window_bounds = array<i64: 1, 8, 256>}, {transform_indices = @transform_5, window_bounds = array<i64: 1, 1, 8, 128>}]} {
    %c0 = arith.constant 0 : index
    %c0_0 = arith.constant 0 : index
    %c0_1 = arith.constant 0 : index
    %0 = vector.load %arg2[%c0, %c0_0, %c0_1] : memref<1x36x256xbf16, #tpu.memory_space<vmem>>, vector<1x36x256xbf16>
    %1 = vector.shape_cast %0 : vector<1x36x256xbf16> to vector<36x256xbf16>
    %c0_2 = arith.constant 0 : index
    %c0_3 = arith.constant 0 : index
    %2 = vector.load %arg3[%c0_2, %c0_3] : memref<16x36xbf16, #tpu.memory_space<vmem>>, vector<16x36xbf16>
    %cst = arith.constant dense<0.000000e+00> : vector<16x256xf32>
    %3 = tpu.matmul %2, %1, %cst {dimension_numbers = #tpu.dot_dimension_numbers<[1], [0], [0], [1], [0, 0, 1, 1], [], []>} : vector<16x36xbf16>, vector<36x256xbf16>, vector<16x256xf32> -> vector<16x256xf32>
    %c0_4 = arith.constant 0 : index
    %c0_5 = arith.constant 0 : index
    %4 = vector.load %arg4[%c0_4, %c0_5] : memref<16x1xf32, #tpu.memory_space<vmem>>, vector<16x1xf32>
    %5 = vector.broadcast %4 : vector<16x1xf32> to vector<16x256xf32>
    %6 = arith.addf %3, %5 : vector<16x256xf32>
    %7 = vector.extract_strided_slice %6 {offsets = [0, 0], sizes = [8, 256], strides = [1, 1]} : vector<16x256xf32> to vector<8x256xf32>
    %8 = vector.extract_strided_slice %6 {offsets = [8, 0], sizes = [8, 256], strides = [1, 1]} : vector<16x256xf32> to vector<8x256xf32>
    %cst_6 = arith.constant 5.000000e-01 : f32
    %9 = vector.broadcast %cst_6 : f32 to vector<8x256xf32>
    %10 = arith.mulf %9, %8 : vector<8x256xf32>
    %11 = math.exp %10 : vector<8x256xf32>
    %c0_7 = arith.constant 0 : index
    %c0_8 = arith.constant 0 : index
    %c0_9 = arith.constant 0 : index
    %12 = vector.load %arg5[%c0_7, %c0_8, %c0_9] : memref<1x8x256xf32, #tpu.memory_space<vmem>>, vector<1x8x256xf32>
    %13 = vector.shape_cast %12 : vector<1x8x256xf32> to vector<8x256xf32>
    %14 = arith.mulf %13, %11 : vector<8x256xf32>
    %15 = arith.addf %14, %7 : vector<8x256xf32>
    %c0_10 = arith.constant 0 : index
    %c0_11 = arith.constant 0 : index
    %c0_12 = arith.constant 0 : index
    %16 = vector.load %arg6[%c0_10, %c0_11, %c0_12] : memref<1x8x256xf32, #tpu.memory_space<vmem>>, vector<1x8x256xf32>
    %17 = vector.shape_cast %16 : vector<1x8x256xf32> to vector<8x256xf32>
    %18 = vector.shape_cast %15 : vector<8x256xf32> to vector<1x8x256xf32>
    tpu.vector_store %arg6[%c0_10, %c0_11, %c0_12], %18 {strides = array<i32>} : memref<1x8x256xf32, #tpu.memory_space<vmem>>, vector<1x8x256xf32>,
    %cst_13 = arith.constant 1.000000e+00 : f32
    %19 = vector.broadcast %cst_13 : f32 to vector<8x256xf32>
    %20 = arith.addf %19, %8 : vector<8x256xf32>
    %21 = arith.mulf %15, %15 : vector<8x256xf32>
    %22 = arith.subf %20, %21 : vector<8x256xf32>
    %23 = arith.mulf %11, %11 : vector<8x256xf32>
    %24 = arith.subf %22, %23 : vector<8x256xf32>
    %25 = vector.extract_strided_slice %24 {offsets = [0, 0], sizes = [8, 128], strides = [1, 1]} : vector<8x256xf32> to vector<8x128xf32>
    %26 = vector.extract_strided_slice %24 {offsets = [0, 128], sizes = [8, 128], strides = [1, 1]} : vector<8x256xf32> to vector<8x128xf32>
    %27 = arith.addf %25, %26 : vector<8x128xf32>
    %cst_14 = arith.constant -5.000000e-01 : f32
    %28 = vector.broadcast %cst_14 : f32 to vector<8x128xf32>
    %29 = arith.mulf %28, %27 : vector<8x128xf32>
    %c0_15 = arith.constant 0 : index
    %c0_16 = arith.constant 0 : index
    %c0_17 = arith.constant 0 : index
    %c0_18 = arith.constant 0 : index
    %30 = vector.load %arg7[%c0_15, %c0_16, %c0_17, %c0_18] : memref<1x1x8x128xf32, #tpu.memory_space<vmem>>, vector<1x1x8x128xf32>
    %31 = vector.shape_cast %30 : vector<1x1x8x128xf32> to vector<8x128xf32>
    %32 = vector.shape_cast %29 : vector<8x128xf32> to vector<1x1x8x128xf32>
    tpu.vector_store %arg7[%c0_15, %c0_16, %c0_17, %c0_18], %32 {strides = array<i32>} : memref<1x1x8x128xf32, #tpu.memory_space<vmem>>, vector<1x1x8x128xf32>,
    return
  }
  func.func @transform_0(%arg0: i32, %arg1: i32) -> (i32, i32, i32) {
    %c0_i32 = arith.constant 0 : i32
    %c0_i32_0 = arith.constant 0 : i32
    return %arg0, %c0_i32, %arg1 : i32, i32, i32
  }
  func.func @transform_1(%arg0: i32, %arg1: i32) -> (i32, i32) {
    %c0_i32 = arith.constant 0 : i32
    %c0_i32_0 = arith.constant 0 : i32
    %c0_i32_1 = arith.constant 0 : i32
    return %c0_i32, %c0_i32_0 : i32, i32
  }
  func.func @transform_2(%arg0: i32, %arg1: i32) -> (i32, i32) {
    %c0_i32 = arith.constant 0 : i32
    %c0_i32_0 = arith.constant 0 : i32
    %c0_i32_1 = arith.constant 0 : i32
    return %c0_i32, %c0_i32_0 : i32, i32
  }
  func.func @transform_3(%arg0: i32, %arg1: i32) -> (i32, i32, i32) {
    %c0_i32 = arith.constant 0 : i32
    %c0_i32_0 = arith.constant 0 : i32
    return %arg0, %c0_i32, %arg1 : i32, i32, i32
  }
  func.func @transform_4(%arg0: i32, %arg1: i32) -> (i32, i32, i32) {
    %c0_i32 = arith.constant 0 : i32
    %c0_i32_0 = arith.constant 0 : i32
    return %arg0, %c0_i32, %arg1 : i32, i32, i32
  }
  func.func @transform_5(%arg0: i32, %arg1: i32) -> (i32, i32, i32, i32) {
    %c0_i32 = arith.constant 0 : i32
    %c0_i32_0 = arith.constant 0 : i32
    %c0_i32_1 = arith.constant 0 : i32
    return %arg0, %arg1, %c0_i32, %c0_i32_0 : i32, i32, i32, i32
  }
}

</mosaic_0001>

<llo_original>
// kernel: tpu_custom_call.1
$region0: #{tpu_custom_call.1}
  #allocation0 [shape = 'u32[]', space=smem, size = 0x4, offset = 0x4, fixed_abs, tag = 'smem constant byte address 0x4 - core index']
  #allocation1 [shape = 'u32[144,128]{1,0:T(1,128)}', space=vmem, size = 0x12000, scoped, tag = 'internal scratch']
  %s0 = inlined_call_operand.vmem [shape: bf16[2,36,256], index: 0, kind: input, shape index: {}]
  %s1 = inlined_call_operand.vmem [shape: bf16[16,36], index: 1, kind: input, shape index: {}]
  %s2 = inlined_call_operand.vmem [shape: f32[16,1], index: 2, kind: input, shape index: {}]
  %s3 = inlined_call_operand.vmem [shape: f32[2,8,256], index: 3, kind: input, shape index: {}]
  %s4 = inlined_call_operand.hbm [shape: f32[2,8,256], index: 4, kind: output, shape index: {0}]
  %s5 = inlined_call_operand.hbm [shape: f32[2,1,8,128], index: 5, kind: output, shape index: {1}]
  %6 = xla_tuple %s4, %s5
  %s7 = sld [smem:[#allocation0]]
  $region57: #{tpu_custom_call.1} parent=0
    _
  %s9 = ssub.s32 1, %s7
  %s10 = scalar_select 0, %s9, %s7
  $region1: #{tpu_custom_call.1} parent=0
    #allocation2 [shape = 'u8[16384]{0}', space=vmem, size = 0x4000, scoped, tag = 'output window, operand 0']
    #allocation3 [shape = 's32[2]{0}', space=sflag, size = 0x8, scoped, tag = 'scoped memory for tpu_custom_call.1']
    #allocation4 [shape = 'u8[8192]{0}', space=vmem, size = 0x2000, scoped, tag = 'output window, operand 1']
    #allocation5 [shape = 's32[2]{0}', space=sflag, size = 0x8, scoped, tag = 'scoped memory for tpu_custom_call.1']
    %11 = vsyncpa [#allocation3], 0
    %s12 = scalar_lea.sflag [#allocation3], 1
    %13 = vsyncpa %s12, 0
    %14 = vsyncpa [#allocation5], 0
    %s15 = scalar_lea.sflag [#allocation5], 1
    %16 = vsyncpa %s15, 0
    loop: start=0, step=1, limit=4
    $region2: #{tpu_custom_call.1} parent=1 // loop_pre_header
      _
    $region3: #{tpu_custom_call.1} parent=1 // loop_header
      %s18 = sphi 0, %s22
      %p19 = scmp.ge.s32.totalorder %s18, 4
      %s25 = sphi 0, %s37
      %s26 = sphi 0, %s33
      %s27 = sphi 0, %s25
      %s28 = sphi 0, %s26
      %s29 = sphi 0, %s27
      %s30 = sphi 0, %s28
      %s42 = sphi 0, %s44
      %s45 = sphi 0, %s42
      %s46 = sphi 0, %s45
      %s62 = sphi 0, %s46
      %s66 = sphi 0, %s66
      %s68 = sphi 0, %s66
      %s69 = sphi 0, %s68
      %s83 = sphi 0, %s69
      %s87 = sphi 0, %s87
      %s89 = sphi 0, %s87
      %s90 = sphi 0, %s89
      %s104 = sphi 0, %s90
      %s112 = sphi 0, %s114
      %s115 = sphi 0, %s112
      %s116 = sphi 0, %s115
      %s132 = sphi 0, %s116
      %s140 = sphi 0, %s142
      %s143 = sphi 0, %s140
      %s144 = sphi 0, %s143
      %s160 = sphi 0, %s144
      %s168 = sphi 0, %s170
      %s171 = sphi 0, %s168
      %s172 = sphi 0, %s171
      %s188 = sphi 0, %s172
    $region4: #{tpu_custom_call.1} parent=1 // loop_header_branch
      %21 = sbr.rel (%p19) target = $region8
    $region5: #{tpu_custom_call.1} parent=1 // loop_body
      %s23 = ssub.s32 %s18, 1
      %s24 = ssub.s32 %s18, 2
      %s31 = sadd.s32 1, %s26
      %p32 = scmp.ge.s32.totalorder %s31, 1
      %s33 = scalar_select %p32, 0, %s31
      %s34 = sadd.s32 1, %s25
      %s35 = scalar_select %p32, %s34, %s25
      %p36 = scmp.ge.s32.totalorder %s35, 2
      %s37 = scalar_select %p36, 0, %s35
      %s38 = ssub.s32 %s25, %s37
      %s39 = ssub.s32 %s26, %s33
      %s40 = sor.u32 %s38, %s39
      %p41 = scmp.eq.s32.totalorder %s40, 0
      %s43 = sadd.s32 %s42, 1
      %s44 = scalar_select %p41, %s42, %s43
      %p47 = pneg %p41
      %p48 = scmp.eq.s32.totalorder %s18, 1
      %p49 = por %p47, %p48
      %p50 = scmp.ne.s32.totalorder %s42, %s45
      %p51 = scmp.eq.s32.totalorder %s18, 0
      %p52 = por %p50, %p51
      %p53 = scmp.ne.s32.totalorder %s42, %s45
      %p54 = scmp.eq.s32.totalorder %s23, 1
      %p55 = por %p53, %p54
      %p56 = scmp.ne.s32.totalorder %s45, %s46
      %p57 = scmp.eq.s32.totalorder %s23, 0
      %p58 = por %p56, %p57
      %p59 = scmp.ne.s32.totalorder %s45, %s46
      %p60 = scmp.eq.s32.totalorder %s24, 1
      %p61 = por %p59, %p60
      %p63 = scmp.ne.s32.totalorder %s46, %s62
      %p64 = scmp.eq.s32.totalorder %s24, 0
      %p65 = por %p63, %p64
      %s67 = sadd.s32 %s66, 1
      %p70 = scmp.eq.s32.totalorder %s18, 1
      %p71 = scmp.ne.s32.totalorder %s66, %s68
      %p72 = scmp.eq.s32.totalorder %s18, 0
      %p73 = por %p71, %p72
      %p74 = scmp.ne.s32.totalorder %s66, %s68
      %p75 = scmp.eq.s32.totalorder %s23, 1
      %p76 = por %p74, %p75
      %p77 = scmp.ne.s32.totalorder %s68, %s69
      %p78 = scmp.eq.s32.totalorder %s23, 0
      %p79 = por %p77, %p78
      %p80 = scmp.ne.s32.totalorder %s68, %s69
      %p81 = scmp.eq.s32.totalorder %s24, 1
      %p82 = por %p80, %p81
      %p84 = scmp.ne.s32.totalorder %s69, %s83
      %p85 = scmp.eq.s32.totalorder %s24, 0
      %p86 = por %p84, %p85
      %s88 = sadd.s32 %s87, 1
      %p91 = scmp.eq.s32.totalorder %s18, 1
      %p92 = scmp.ne.s32.totalorder %s87, %s89
      %p93 = scmp.eq.s32.totalorder %s18, 0
      %p94 = por %p92, %p93
      %p95 = scmp.ne.s32.totalorder %s87, %s89
      %p96 = scmp.eq.s32.totalorder %s23, 1
      %p97 = por %p95, %p96
      %p98 = scmp.ne.s32.totalorder %s89, %s90
      %p99 = scmp.eq.s32.totalorder %s23, 0
      %p100 = por %p98, %p99
      %p101 = scmp.ne.s32.totalorder %s89, %s90
      %p102 = scmp.eq.s32.totalorder %s24, 1
      %p103 = por %p101, %p102
      %p105 = scmp.ne.s32.totalorder %s90, %s104
      %p106 = scmp.eq.s32.totalorder %s24, 0
      %p107 = por %p105, %p106
      %s108 = ssub.s32 %s25, %s37
      %s109 = ssub.s32 %s26, %s33
      %s110 = sor.u32 %s108, %s109
      %p111 = scmp.eq.s32.totalorder %s110, 0
      %s113 = sadd.s32 %s112, 1
      %s114 = scalar_select %p111, %s112, %s113
      %p117 = pneg %p111
      %p118 = scmp.eq.s32.totalorder %s18, 1
      %p119 = por %p117, %p118
      %p120 = scmp.ne.s32.totalorder %s112, %s115
      %p121 = scmp.eq.s32.totalorder %s18, 0
      %p122 = por %p120, %p121
      %p123 = scmp.ne.s32.totalorder %s112, %s115
      %p124 = scmp.eq.s32.totalorder %s23, 1
      %p125 = por %p123, %p124
      %p126 = scmp.ne.s32.totalorder %s115, %s116
      %p127 = scmp.eq.s32.totalorder %s23, 0
      %p128 = por %p126, %p127
      %p129 = scmp.ne.s32.totalorder %s115, %s116
      %p130 = scmp.eq.s32.totalorder %s24, 1
      %p131 = por %p129, %p130
      %p133 = scmp.ne.s32.totalorder %s116, %s132
      %p134 = scmp.eq.s32.totalorder %s24, 0
      %p135 = por %p133, %p134
      %s136 = ssub.s32 %s25, %s37
      %s137 = ssub.s32 %s26, %s33
      %s138 = sor.u32 %s136, %s137
      %p139 = scmp.eq.s32.totalorder %s138, 0
      %s141 = sadd.s32 %s140, 1
      %s142 = scalar_select %p139, %s140, %s141
      %p145 = pneg %p139
      %p146 = scmp.eq.s32.totalorder %s18, 1
      %p147 = por %p145, %p146
      %p148 = scmp.ne.s32.totalorder %s140, %s143
      %p149 = scmp.eq.s32.totalorder %s18, 0
      %p150 = por %p148, %p149
      %p151 = scmp.ne.s32.totalorder %s140, %s143
      %p152 = scmp.eq.s32.totalorder %s23, 1
      %p153 = por %p151, %p152
      %p154 = scmp.ne.s32.totalorder %s143, %s144
      %p155 = scmp.eq.s32.totalorder %s23, 0
      %p156 = por %p154, %p155
      %p157 = scmp.ne.s32.totalorder %s143, %s144
      %p158 = scmp.eq.s32.totalorder %s24, 1
      %p159 = por %p157, %p158
      %p161 = scmp.ne.s32.totalorder %s144, %s160
      %p162 = scmp.eq.s32.totalorder %s24, 0
      %p163 = por %p161, %p162
      %s164 = ssub.s32 %s25, %s37
      %s165 = ssub.s32 %s26, %s33
      %s166 = sor.u32 %s164, %s165
      %p167 = scmp.eq.s32.totalorder %s166, 0
      %s169 = sadd.s32 %s168, 1
      %s170 = scalar_select %p167, %s168, %s169
      %p173 = pneg %p167
      %p174 = scmp.eq.s32.totalorder %s18, 1
      %p175 = por %p173, %p174
      %p176 = scmp.ne.s32.totalorder %s168, %s171
      %p177 = scmp.eq.s32.totalorder %s18, 0
      %p178 = por %p176, %p177
      %p179 = scmp.ne.s32.totalorder %s168, %s171
      %p180 = scmp.eq.s32.totalorder %s23, 1
      %p181 = por %p179, %p180
      %p182 = scmp.ne.s32.totalorder %s171, %s172
      %p183 = scmp.eq.s32.totalorder %s23, 0
      %p184 = por %p182, %p183
      %p185 = scmp.ne.s32.totalorder %s171, %s172
      %p186 = scmp.eq.s32.totalorder %s24, 1
      %p187 = por %p185, %p186
      %p189 = scmp.ne.s32.totalorder %s172, %s188
      %p190 = scmp.eq.s32.totalorder %s24, 0
      %p191 = por %p189, %p190
      %p192 = scmp.le.s32.totalorder 1, %s18
      %p193 = scmp.lt.s32.totalorder %s18, 3
      %p194 = pnand %p192, %p193
      %p195 = pneg %p194
      // Predicated region
      $region9: #{tpu_custom_call.1} parent=5 // pred_check
        _
      $region10: #{tpu_custom_call.1} parent=5 // pred_check_branch
        %197 = sbr.rel (%p194) target = $region12
      $region11: #{tpu_custom_call.1} parent=5 // pred_region
        %s198 = ssub.s32 %s18, 1
        // Predicated region
        $region13: #{tpu_custom_call.1} parent=11 // pred_check
          %p199 = pneg %p79
        $region14: #{tpu_custom_call.1} parent=11 // pred_check_branch
          %201 = sbr.rel (%p199) target = $region16
        $region15: #{tpu_custom_call.1} parent=11 // pred_region
          _
        $region16: #{tpu_custom_call.1} parent=11 // pred_fallthru
          _
        // Predicated region
        $region17: #{tpu_custom_call.1} parent=11 // pred_check
          %p202 = pneg %p100
        $region18: #{tpu_custom_call.1} parent=11 // pred_check_branch
          %204 = sbr.rel (%p202) target = $region20
        $region19: #{tpu_custom_call.1} parent=11 // pred_region
          _
        $region20: #{tpu_custom_call.1} parent=11 // pred_fallthru
          _
      $region12: #{tpu_custom_call.1} parent=5 // pred_fallthru
        _
      %p205 = scmp.lt.s32.totalorder %s18, 2
      // Predicated region
      $region21: #{tpu_custom_call.1} parent=5 // pred_check
        %p206 = pneg %p205
      $region22: #{tpu_custom_call.1} parent=5 // pred_check_branch
        %208 = sbr.rel (%p206) target = $region24
      $region23: #{tpu_custom_call.1} parent=5 // pred_region
        // Predicated region
        $region25: #{tpu_custom_call.1} parent=23 // pred_check
          %p209 = pneg %p52
        $region26: #{tpu_custom_call.1} parent=23 // pred_check_branch
          %211 = sbr.rel (%p209) target = $region28
        $region27: #{tpu_custom_call.1} parent=23 // pred_region
          %s212 = smul.u32 2, %s26
          %p213 = scmp.lt.s32.totalorder %s25, 1
          %s214 = scalar_select %p213, %s25, 1
          %p215 = scmp.lt.s32.totalorder %s212, 1
          %s216 = scalar_select %p215, %s212, 1
          %s217 = smul.addr %s214, 10
          %s218 = sadd.s32 %s216, %s217
          %s219 = smul.addr %s218, 4
          %s220 = scalar_lea.vmem %s0, %s219
          %s221 = smul.u32 2, %s26
        $region28: #{tpu_custom_call.1} parent=23 // pred_fallthru
          _
        // Predicated region
        $region29: #{tpu_custom_call.1} parent=23 // pred_check
          %p222 = pneg %p122
        $region30: #{tpu_custom_call.1} parent=23 // pred_check_branch
          %224 = sbr.rel (%p222) target = $region32
        $region31: #{tpu_custom_call.1} parent=23 // pred_region
          %s225 = smul.u32 2, %s26
          %p226 = scmp.lt.s32.totalorder %s25, 1
          %s227 = scalar_select %p226, %s25, 1
          %p228 = scmp.lt.s32.totalorder %s225, 1
          %s229 = scalar_select %p228, %s225, 1
          %s230 = smul.addr %s227, 2
          %s231 = sadd.s32 %s229, %s230
          %s232 = smul.addr %s231, 8
          %s233 = scalar_lea.vmem %s3, %s232
          %s234 = smul.u32 2, %s26
        $region32: #{tpu_custom_call.1} parent=23 // pred_fallthru
          _
      $region24: #{tpu_custom_call.1} parent=5 // pred_fallthru
        _
      %p235 = scmp.le.s32.totalorder 1, %s18
      %p236 = scmp.lt.s32.totalorder %s18, 3
      %p237 = pnand %p235, %p236
      %p238 = pneg %p237
      // Predicated region
      $region33: #{tpu_custom_call.1} parent=5 // pred_check
        _
      $region34: #{tpu_custom_call.1} parent=5 // pred_check_branch
        %240 = sbr.rel (%p237) target = $region36
      $region35: #{tpu_custom_call.1} parent=5 // pred_region
        %s241 = ssub.s32 %s18, 1
        %s242 = smul.u32 2, %s28
        %p243 = scmp.lt.s32.totalorder %s27, 1
        %s244 = scalar_select %p243, %s27, 1
        %p245 = scmp.lt.s32.totalorder %s242, 1
        %s246 = scalar_select %p245, %s242, 1
        %s247 = smul.addr %s244, 10
        %s248 = sadd.s32 %s246, %s247
        %s249 = smul.addr %s248, 4
        %s250 = scalar_lea.vmem %s0, %s249
        %p251 = pneg %p58
        %p252 = pneg %p55
        %p253 = pneg %p79
        %p254 = pneg %p76
        %p255 = pneg %p100
        %p256 = pneg %p97
        %s257 = smul.u32 2, %s28
        %p258 = scmp.lt.s32.totalorder %s27, 1
        %s259 = scalar_select %p258, %s27, 1
        %p260 = scmp.lt.s32.totalorder %s257, 1
        %s261 = scalar_select %p260, %s257, 1
        %s262 = smul.addr %s259, 2
        %s263 = sadd.s32 %s261, %s262
        %s264 = smul.addr %s263, 8
        %s265 = scalar_lea.vmem %s3, %s264
        %p266 = pneg %p128
        %p267 = pneg %p125
        %p268 = pneg %p156
        %p269 = pneg %p153
        %s270 = sand.u32 %s143, 1
        %s271 = scalar_lea.sflag [#allocation3], %s270
        %s272 = sand.u32 %s143, 1
        %s273 = smul.addr %s272, 16
        %s274 = scalar_lea.vmem [#allocation2], %s273
        %p275 = pneg %p184
        %p276 = pneg %p181
        %s277 = sand.u32 %s171, 1
        %s278 = scalar_lea.sflag [#allocation5], %s277
        %s279 = sand.u32 %s171, 1
        %s280 = smul.addr %s279, 8
        %s281 = scalar_lea.vmem [#allocation4], %s280
        %s282 = smul.u32 2, %s28
        %p283 = scmp.lt.s32.totalorder %s27, 1
        %s284 = scalar_select %p283, %s27, 1
        %p285 = scmp.lt.s32.totalorder %s282, 1
        %s286 = scalar_select %p285, %s282, 1
        %s287 = smul.addr %s284, 10
        %s288 = sadd.s32 %s286, %s287
        %s289 = smul.addr %s288, 4
        %s290 = scalar_lea.vmem %s0, %s289
        %s291 = smul.u32 2, %s28
        %s292 = smul.u32 2, %s28
        %p293 = scmp.lt.s32.totalorder %s27, 1
        %s294 = scalar_select %p293, %s27, 1
        %p295 = scmp.lt.s32.totalorder %s292, 1
        %s296 = scalar_select %p295, %s292, 1
        %s297 = smul.addr %s294, 2
        %s298 = sadd.s32 %s296, %s297
        %s299 = smul.addr %s298, 8
        %s300 = scalar_lea.vmem %s3, %s299
        %s301 = smul.u32 2, %s28
        %s302 = smul.u32 2, %s28
        %v304 = vld [vmem:[%s290] sm:$0xff]
        %v305 = vld [vmem:[%s290 + $0x8] sm:$0xff]
        %v306 = vld [vmem:[%s290 + $0x10] sm:$0xff]
        %v307 = vld [vmem:[%s290 + $0x18] sm:$0xff]
        %v308 = vld [vmem:[%s290 + $0x20] sm:$0x33]
        %v309 = vld [vmem:[%s1] sm:$0xf]
        %v310 = vld [vmem:[%s1 + $0x4] sm:$0xf]
        %v311 = vld [vmem:[%s2] sm:$0xff]
        %v312 = vld [vmem:[%s2 + $0x8] sm:$0xff]
        %314 = vset.pattern.permute.xlu0 0
        %315 = vperm.xlu0 %314, %v311
        %v316 = vpop.permute.xlu0 %315
        %319 = vset.pattern.permute.xlu0 0
        %320 = vperm.xlu0 %319, %v312
        %v321 = vpop.permute.xlu0 %320
        %v325 = vunpack.c.l.b16 %v309
        %v326 = vunpack.c.l.b16 %v310
        %v327 = vpack.c.b16 %v326, %v325
        %v333 = vunpack.c.l.b16 %v304
        %v334 = vunpack.c.h.b16 %v304
        %v335 = vunpack.c.l.b16 %v305
        %v336 = vunpack.c.h.b16 %v305
        %v337 = vunpack.c.l.b16 %v306
        %v338 = vunpack.c.h.b16 %v306
        %v339 = vunpack.c.l.b16 %v307
        %v340 = vunpack.c.h.b16 %v307
        %v341 = vunpack.c.l.b16 %v308
        %v342 = vunpack.c.h.b16 %v308
        %v343 = vpack.c.b16 %v335, %v333
        %v344 = vpack.c.b16 %v336, %v334
        %v345 = vpack.c.b16 %v339, %v337
        %v346 = vpack.c.b16 %v340, %v338
        %v347 = vpack.c.b16 %v341, %v341
        %v348 = vpack.c.b16 %v342, %v342
        %vm353 = vcmask 293888
        %v355 = vsel %vm353, %v327, 0
        %vm357 = vcmask 1041408
        %v359 = vsel %vm357, %v347, 0
        %v362 = vsel %vm357, %v348, 0
        %364 = vmatprep.subr.bf16.mxu0 %v344
        %365 = vmatpush1.bf16.msra.mxu0 %v343
        %366 = vmatprep.subr.bf16.mxu0 %v346
        %367 = vmatpush1.bf16.msra.mxu0 %v345
        %368 = vmatprep.subr.bf16.mxu0 %v362
        %369 = vmatpush1.bf16.msra.mxu0 %v359
        %370 = vmatprep.subr.bf16.mxu0 0
        %371 = vmatpush1.bf16.msra.mxu0 0
        %372 = vmatprep.subr.bf16.mxu0 0
        %373 = vmatpush1.bf16.msra.mxu0 0
        %374 = vmatprep.subr.bf16.mxu0 0
        %375 = vmatpush1.bf16.msra.mxu0 0
        %376 = vmatprep.subr.bf16.mxu0 0
        %377 = vmatpush1.bf16.msra.mxu0 0
        %378 = vmatprep.subr.bf16.mxu0 0
        %379 = vmatpush1.bf16.msra.mxu0 0
        %380 = vmatprep.subr.bf16.mxu0 0
        %381 = vmatpush1.bf16.msra.mxu0 0
        %382 = vmatprep.subr.bf16.mxu0 0
        %383 = vmatpush1.bf16.msra.mxu0 0
        %384 = vmatprep.subr.bf16.mxu0 0
        %385 = vmatpush1.bf16.msra.mxu0 0
        %386 = vmatprep.subr.bf16.mxu0 0
        %387 = vmatpush1.bf16.msra.mxu0 0
        %388 = vmatprep.subr.bf16.mxu0 0
        %389 = vmatpush1.bf16.msra.mxu0 0
        %390 = vmatprep.subr.bf16.mxu0 0
        %391 = vmatpush1.bf16.msra.mxu0 0
        %392 = vmatprep.subr.bf16.mxu0 0
        %393 = vmatpush1.bf16.msra.mxu0 0
        %394 = vmatprep.subr.bf16.mxu0 0
        %395 = vmatpush1.bf16.msra.mxu0 0
        %396 = vmatprep.mubr.bf16.mxu0 0
        %397 = vmatmul.mubr.bf16.gmra.mrb[0].mxu0 %v355
        %v398 = vpop.f32.mrb[0].mxu0
        %v399 = vadd.f32 %v316, %v398
        %v400 = vpop.f32.mrb[0].mxu0
        %v401 = vadd.f32 %v316, %v400
        %v402 = vpop.f32.mrb[0].mxu0
        %v403 = vadd.f32 %v321, %v402
        %v404 = vpop.f32.mrb[0].mxu0
        %v405 = vadd.f32 %v321, %v404
        %406 = vdwg.mxu0
        %v407 = vmul.f32 %v403, 0.5
        %v408 = vmul.f32 %v405, 0.5
        %v409 = vmul.f32 %v407, 1.442695
        %v410 = vpow.pop %v409
        %v411 = vmul.f32 %v408, 1.442695
        %v412 = vpow.pop %v411
        %v413 = vld [vmem:[%s300] sm:$0xff]
        %v414 = vld [vmem:[%s300 + $0x8] sm:$0xff]
        %v415 = vmul.f32 %v413, %v410
        %v416 = vmul.f32 %v414, %v412
        %v417 = vadd.f32 %v415, %v399
        %v418 = vadd.f32 %v416, %v401
        %419 = vst [vmem:[%s274] sm:$0xff] %v417
        %420 = vst [vmem:[%s274 + $0x8] sm:$0xff] %v418
        %v421 = vadd.f32 %v403, 1.0
        %v422 = vadd.f32 %v405, 1.0
        %v423 = vmul.f32 %v417, %v417
        %v424 = vmul.f32 %v418, %v418
        %v425 = vsub.f32 %v421, %v423
        %v426 = vsub.f32 %v422, %v424
        %v427 = vmul.f32 %v410, %v410
        %v428 = vmul.f32 %v412, %v412
        %v429 = vsub.f32 %v425, %v427
        %v430 = vsub.f32 %v426, %v428
        %v431 = vadd.f32 %v429, %v430
        %v432 = vmul.f32 %v431, -0.5
        %433 = vst [vmem:[%s281] sm:$0xff] %v432
        %s434 = sand.u32 %s143, 1
        %s435 = scalar_lea.sflag [#allocation3], %s434
        %s436 = sand.u32 %s143, 1
        %s437 = smul.addr %s436, 16
        %s438 = scalar_lea.vmem [#allocation2], %s437
        %s439 = sand.u32 %s171, 1
        %s440 = scalar_lea.sflag [#allocation5], %s439
        %s441 = sand.u32 %s171, 1
        %s442 = smul.addr %s441, 8
        %s443 = scalar_lea.vmem [#allocation4], %s442
        // Predicated region
        $region37: #{tpu_custom_call.1} parent=35 // pred_check
          %p444 = pneg %p153
        $region38: #{tpu_custom_call.1} parent=35 // pred_check_branch
          %446 = sbr.rel (%p444) target = $region40
        $region39: #{tpu_custom_call.1} parent=35 // pred_region
          %s447 = smul.u32 2, %s28
          %s449 = ssub.s32 256, 256
          %450 = vsyncadd %s435, %s449
          %s451 = smul.addr %s27, 2
          %s452 = sadd.s32 %s447, %s451
          %s453 = smul.addr %s452, 128
          %s454 = scalar_lea.hbm %s4, %s453
          %s456 = sshll.u32 %s438, 4
          %s457 = int_to_ptr.vmem [resolvable:$true] %s456
          %459 = dma.vmem_to_hbm [thread:$0]  %s457, 256, %s454, %s435
        $region40: #{tpu_custom_call.1} parent=35 // pred_fallthru
          _
        // Predicated region
        $region41: #{tpu_custom_call.1} parent=35 // pred_check
          %p460 = pneg %p181
        $region42: #{tpu_custom_call.1} parent=35 // pred_check_branch
          %462 = sbr.rel (%p460) target = $region44
        $region43: #{tpu_custom_call.1} parent=35 // pred_region
          %s464 = ssub.s32 128, 128
          %465 = vsyncadd %s440, %s464
          %s466 = sadd.s32 %s28, %s27
          %s467 = smul.addr %s466, 128
          %s468 = scalar_lea.hbm %s5, %s467
          %s470 = sshll.u32 %s443, 4
          %s471 = int_to_ptr.vmem [resolvable:$true] %s470
          %473 = dma.vmem_to_hbm [thread:$0]  %s471, 128, %s468, %s440
        $region44: #{tpu_custom_call.1} parent=35 // pred_fallthru
          _
      $region36: #{tpu_custom_call.1} parent=5 // pred_fallthru
        _
      %p474 = scmp.le.s32.totalorder 2, %s18
      // Predicated region
      $region45: #{tpu_custom_call.1} parent=5 // pred_check
        %p475 = pneg %p474
      $region46: #{tpu_custom_call.1} parent=5 // pred_check_branch
        %477 = sbr.rel (%p475) target = $region48
      $region47: #{tpu_custom_call.1} parent=5 // pred_region
        %s478 = ssub.s32 %s18, 2
        // Predicated region
        $region49: #{tpu_custom_call.1} parent=47 // pred_check
          %p479 = pneg %p159
        $region50: #{tpu_custom_call.1} parent=47 // pred_check_branch
          %481 = sbr.rel (%p479) target = $region52
        $region51: #{tpu_custom_call.1} parent=47 // pred_region
          %s482 = sand.u32 %s144, 1
          %s483 = scalar_lea.sflag [#allocation3], %s482
          %s484 = sand.u32 %s144, 1
          %s485 = smul.addr %s484, 16
          %s486 = scalar_lea.vmem [#allocation2], %s485
          %487 = dma.done %s483, 256
        $region52: #{tpu_custom_call.1} parent=47 // pred_fallthru
          _
        // Predicated region
        $region53: #{tpu_custom_call.1} parent=47 // pred_check
          %p488 = pneg %p187
        $region54: #{tpu_custom_call.1} parent=47 // pred_check_branch
          %490 = sbr.rel (%p488) target = $region56
        $region55: #{tpu_custom_call.1} parent=47 // pred_region
          %s491 = sand.u32 %s172, 1
          %s492 = scalar_lea.sflag [#allocation5], %s491
          %s493 = sand.u32 %s172, 1
          %s494 = smul.addr %s493, 8
          %s495 = scalar_lea.vmem [#allocation4], %s494
          %496 = dma.done %s492, 128
        $region56: #{tpu_custom_call.1} parent=47 // pred_fallthru
          _
      $region48: #{tpu_custom_call.1} parent=5 // pred_fallthru
        _
    $region6: #{tpu_custom_call.1} parent=1 // loop_footer
      %s22 = sadd.s32 1, %s18
    $region7: #{tpu_custom_call.1} parent=1 // loop_footer_branch
      %17 = sbr.rel target = $region3
    $region8: #{tpu_custom_call.1} parent=1 // loop_exit
      _
    %497 = vsyncpa [#allocation3], 1
    %s498 = scalar_lea.sflag [#allocation3], 1
    %499 = vsyncpa %s498, 1
    %500 = vsyncpa [#allocation5], 1
    %s501 = scalar_lea.sflag [#allocation5], 1
    %502 = vsyncpa %s501, 1

</llo_original>
